<compile_context>
chip_gen: v6e
topology: v6e:2x2x1
jax: 0.10.0
libtpu: 0.0.40
codegen_flags: <defaults>
</compile_context>

<pallas_src>
import functools

import jax
import jax.numpy as jnp
from jax.experimental import pallas as pl
from jax.experimental.pallas import tpu as pltpu

_INV_SQRT2 = 0.7071067811865476


def _gelu_exact(x):
    # exact GELU: 0.5 * x * (1 + erf(x / sqrt(2)))  (PyTorch nn.GELU default)
    return 0.5 * x * (1.0 + jax.lax.erf(x * _INV_SQRT2))


def _mlp_kernel(x_ref, wh_ref, bh_ref, wo_ref, bo_ref, o_ref, *, n_layer):
    """One lane-major row tile of the whole MLP.

    x_ref : (n_state, TM)                 input tile, rows in lanes
    wh_ref: (n_layer, n_state, n_state)   hidden weights, PyTorch (out, in)
    bh_ref: (n_layer, n_state, 1)         hidden biases (broadcast over lanes)
    wo_ref: (n_state, 1)                  output weight as a column
    bo_ref: (1, 1)                        output bias
    o_ref : (1, TM)                       lane-dense output tile
    """
    h = x_ref[...].astype(jnp.float32)
    for l in range(n_layer):  # static Python loop (n_layer is compile-time)
        w = wh_ref[l]                         # (n_state, n_state), (out, in)
        b = bh_ref[l]                         # (n_state, 1) -> broadcast lanes
        h = jnp.dot(w, h, preferred_element_type=jnp.float32) + b
        h = _gelu_exact(h)
    # Final Linear(n_state, 1): VPU multiply + sublane reduction (XLU) instead
    # of a near-empty N=1 MXU pass.
    out = jnp.sum(h * wo_ref[...], axis=0, keepdims=True) + bo_ref[...]
    o_ref[...] = out.astype(o_ref.dtype)


def frame_prosody_mlp(x, w_hidden, b_hidden, w_out, b_out, *, tile_m=512):
    """x: (B, T, n_state) -> (B, T, 1).

    Weights are in PyTorch-native layout:
      w_hidden: (n_layer, n_state, n_state)  (out, in)
      b_hidden: (n_layer, n_state)
      w_out   : (1, n_state)
      b_out   : (1,)
    """
    B, T, n_state = x.shape
    n_layer = w_hidden.shape[0]
    M = B * T

    n_tiles = pl.cdiv(M, tile_m)
    M_pad = n_tiles * tile_m

    # rows -> lanes: (n_state, M), zero-padded to a multiple of tile_m.
    x_t = x.reshape(M, n_state).T
    if M_pad != M:
        x_t = jnp.pad(x_t, ((0, 0), (0, M_pad - M)))

    bh = b_hidden.reshape(n_layer, n_state, 1)
    wo = w_out.reshape(1, n_state).T          # (n_state, 1)
    bo = b_out.reshape(1, 1)

    kernel = functools.partial(_mlp_kernel, n_layer=n_layer)

    itemsize = jnp.dtype(x.dtype).itemsize
    weight_bytes = (
        w_hidden.size * jnp.dtype(w_hidden.dtype).itemsize
        + b_hidden.size * jnp.dtype(b_hidden.dtype).itemsize
        + w_out.size * jnp.dtype(w_out.dtype).itemsize
        + b_out.size * jnp.dtype(b_out.dtype).itemsize
    )
    cost = pl.CostEstimate(
        flops=2 * M_pad * n_layer * n_state * n_state + 2 * M_pad * n_state,
        transcendentals=M_pad * n_layer * n_state,
        bytes_accessed=(M_pad * n_state + M_pad) * itemsize + weight_bytes,
    )

    out2d = pl.pallas_call(
        kernel,
        out_shape=jax.ShapeDtypeStruct((1, M_pad), x.dtype),
        grid_spec=pltpu.PrefetchScalarGridSpec(
            num_scalar_prefetch=0,
            grid=(n_tiles,),
            in_specs=[
                pl.BlockSpec((n_state, tile_m), lambda i: (0, i)),
                # Weights/biases: constant block index -> resident across grid.
                pl.BlockSpec((n_layer, n_state, n_state), lambda i: (0, 0, 0)),
                pl.BlockSpec((n_layer, n_state, 1), lambda i: (0, 0, 0)),
                pl.BlockSpec((n_state, 1), lambda i: (0, 0)),
                pl.BlockSpec((1, 1), lambda i: (0, 0)),
            ],
            out_specs=pl.BlockSpec((1, tile_m), lambda i: (0, i)),
        ),
        compiler_params=pltpu.CompilerParams(
            dimension_semantics=("parallel",)),
        cost_estimate=cost,
    )(x_t, w_hidden, bh, wo, bo)

    return out2d[0, :M].reshape(B, T, 1)


def _reference(x, w_hidden, b_hidden, w_out, b_out):
    """Plain-JAX reference mirroring the PyTorch forward (f32)."""
    h = x.astype(jnp.float32)
    n_layer = w_hidden.shape[0]
    for l in range(n_layer):
        h = h @ w_hidden[l].T + b_hidden[l]
        h = _gelu_exact(h)
    return (h @ w_out.T + b_out).astype(x.dtype)


if __name__ == "__main__":
    # Small, module-consistent shapes: n_state=32, n_layer=2, batch=2, seq=8.
    n_state = 32
    n_layer = 2
    B, T = 2, 8

    key = jax.random.PRNGKey(0)
    kx, kw, kb, kwo, kbo = jax.random.split(key, 5)

    x = jax.random.normal(kx, (B, T, n_state), dtype=jnp.float32)
    # PyTorch-native layouts: hidden weights (out, in), output weight (1, in).
    w_hidden = jax.random.normal(kw, (n_layer, n_state, n_state), jnp.float32) * 0.1
    b_hidden = jax.random.normal(kb, (n_layer, n_state), jnp.float32) * 0.1
    w_out = jax.random.normal(kwo, (1, n_state), jnp.float32) * 0.1
    b_out = jax.random.normal(kbo, (1,), jnp.float32) * 0.1

    out = frame_prosody_mlp(x, w_hidden, b_hidden, w_out, b_out)
    out = jax.block_until_ready(out)

    ref = _reference(x, w_hidden, b_hidden, w_out, b_out)
    assert out.shape == (B, T, 1)
    assert jnp.allclose(out, ref, atol=1e-5, rtol=1e-5)

    print("KERNEL_OK")
</pallas_src>

<mosaic_0001>
module attributes {stable_mosaic.version = 11 : i64} {
  func.func @_mlp_kernel(%arg0: i32, %arg1: memref<32x512xf32, #tpu.memory_space<vmem>>, %arg2: memref<2x32x32xf32, #tpu.memory_space<vmem>>, %arg3: memref<2x32x1xf32, #tpu.memory_space<vmem>>, %arg4: memref<32x1xf32, #tpu.memory_space<vmem>>, %arg5: memref<1x1xf32, #tpu.memory_space<vmem>>, %arg6: memref<1x512xf32, #tpu.memory_space<vmem>>) attributes {dimension_semantics = [#tpu.dimension_semantics<parallel>], iteration_bounds = array<i64: 1>, scalar_prefetch = 0 : i64, scratch_operands = 0 : i64, tpu.core_type = #tpu.core_type<tc>, window_params = [{transform_indices = @transform_0, window_bounds = array<i64: 32, 512>}, {pipeline_mode = #tpu.pipeline_mode<synchronous>, transform_indices = @transform_1, window_bounds = array<i64: 2, 32, 32>}, {pipeline_mode = #tpu.pipeline_mode<synchronous>, transform_indices = @transform_2, window_bounds = array<i64: 2, 32, 1>}, {pipeline_mode = #tpu.pipeline_mode<synchronous>, transform_indices = @transform_3, window_bounds = array<i64: 32, 1>}, {pipeline_mode = #tpu.pipeline_mode<synchronous>, transform_indices = @transform_4, window_bounds = array<i64: 1, 1>}, {transform_indices = @transform_5, window_bounds = array<i64: 1, 512>}]} {
    %c0 = arith.constant 0 : index
    %c0_0 = arith.constant 0 : index
    %0 = vector.load %arg1[%c0, %c0_0] : memref<32x512xf32, #tpu.memory_space<vmem>>, vector<32x512xf32>
    %c0_1 = arith.constant 0 : index
    %c0_2 = arith.constant 0 : index
    %c0_3 = arith.constant 0 : index
    %1 = vector.load %arg2[%c0_1, %c0_2, %c0_3] : memref<2x32x32xf32, #tpu.memory_space<vmem>>, vector<1x32x32xf32>
    %2 = vector.shape_cast %1 : vector<1x32x32xf32> to vector<32x32xf32>
    %c0_4 = arith.constant 0 : index
    %c0_5 = arith.constant 0 : index
    %c0_6 = arith.constant 0 : index
    %3 = vector.load %arg3[%c0_4, %c0_5, %c0_6] : memref<2x32x1xf32, #tpu.memory_space<vmem>>, vector<1x32x1xf32>
    %4 = vector.shape_cast %3 : vector<1x32x1xf32> to vector<32x1xf32>
    %cst = arith.constant dense<0.000000e+00> : vector<32x512xf32>
    %5 = tpu.matmul %2, %0, %cst {dimension_numbers = #tpu.dot_dimension_numbers<[1], [0], [0], [1], [0, 0, 1, 1], [], []>} : vector<32x32xf32>, vector<32x512xf32>, vector<32x512xf32> -> vector<32x512xf32>
    %6 = vector.broadcast %4 : vector<32x1xf32> to vector<32x512xf32>
    %7 = arith.addf %5, %6 : vector<32x512xf32>
    %cst_7 = arith.constant 5.000000e-01 : f32
    %8 = vector.broadcast %cst_7 : f32 to vector<32x512xf32>
    %9 = arith.mulf %8, %7 : vector<32x512xf32>
    %cst_8 = arith.constant 0.707106769 : f32
    %10 = vector.broadcast %cst_8 : f32 to vector<32x512xf32>
    %11 = arith.mulf %7, %10 : vector<32x512xf32>
    %12 = math.erf %11 : vector<32x512xf32>
    %cst_9 = arith.constant 1.000000e+00 : f32
    %13 = vector.broadcast %cst_9 : f32 to vector<32x512xf32>
    %14 = arith.addf %13, %12 : vector<32x512xf32>
    %15 = arith.mulf %9, %14 : vector<32x512xf32>
    %c1 = arith.constant 1 : index
    %c0_10 = arith.constant 0 : index
    %c0_11 = arith.constant 0 : index
    %16 = vector.load %arg2[%c1, %c0_10, %c0_11] : memref<2x32x32xf32, #tpu.memory_space<vmem>>, vector<1x32x32xf32>
    %17 = vector.shape_cast %16 : vector<1x32x32xf32> to vector<32x32xf32>
    %c1_12 = arith.constant 1 : index
    %c0_13 = arith.constant 0 : index
    %c0_14 = arith.constant 0 : index
    %18 = vector.load %arg3[%c1_12, %c0_13, %c0_14] : memref<2x32x1xf32, #tpu.memory_space<vmem>>, vector<1x32x1xf32>
    %19 = vector.shape_cast %18 : vector<1x32x1xf32> to vector<32x1xf32>
    %cst_15 = arith.constant dense<0.000000e+00> : vector<32x512xf32>
    %20 = tpu.matmul %17, %15, %cst_15 {dimension_numbers = #tpu.dot_dimension_numbers<[1], [0], [0], [1], [0, 0, 1, 1], [], []>} : vector<32x32xf32>, vector<32x512xf32>, vector<32x512xf32> -> vector<32x512xf32>
    %21 = vector.broadcast %19 : vector<32x1xf32> to vector<32x512xf32>
    %22 = arith.addf %20, %21 : vector<32x512xf32>
    %cst_16 = arith.constant 5.000000e-01 : f32
    %23 = vector.broadcast %cst_16 : f32 to vector<32x512xf32>
    %24 = arith.mulf %23, %22 : vector<32x512xf32>
    %cst_17 = arith.constant 0.707106769 : f32
    %25 = vector.broadcast %cst_17 : f32 to vector<32x512xf32>
    %26 = arith.mulf %22, %25 : vector<32x512xf32>
    %27 = math.erf %26 : vector<32x512xf32>
    %cst_18 = arith.constant 1.000000e+00 : f32
    %28 = vector.broadcast %cst_18 : f32 to vector<32x512xf32>
    %29 = arith.addf %28, %27 : vector<32x512xf32>
    %30 = arith.mulf %24, %29 : vector<32x512xf32>
    %c0_19 = arith.constant 0 : index
    %c0_20 = arith.constant 0 : index
    %31 = vector.load %arg4[%c0_19, %c0_20] : memref<32x1xf32, #tpu.memory_space<vmem>>, vector<32x1xf32>
    %32 = vector.broadcast %31 : vector<32x1xf32> to vector<32x512xf32>
    %33 = arith.mulf %30, %32 : vector<32x512xf32>
    %cst_21 = arith.constant dense<0.000000e+00> : vector<512xf32>
    %34 = vector.multi_reduction <add>, %33, %cst_21 [0] : vector<32x512xf32> to vector<512xf32>
    %35 = vector.shape_cast %34 : vector<512xf32> to vector<1x512xf32>
    %c0_22 = arith.constant 0 : index
    %c0_23 = arith.constant 0 : index
    %36 = vector.load %arg5[%c0_22, %c0_23] : memref<1x1xf32, #tpu.memory_space<vmem>>, vector<1x1xf32>
    %37 = vector.broadcast %36 : vector<1x1xf32> to vector<1x512xf32>
    %38 = arith.addf %35, %37 : vector<1x512xf32>
    %c0_24 = arith.constant 0 : index
    %c0_25 = arith.constant 0 : index
    %39 = vector.load %arg6[%c0_24, %c0_25] : memref<1x512xf32, #tpu.memory_space<vmem>>, vector<1x512xf32>
    tpu.vector_store %arg6[%c0_24, %c0_25], %38 {strides = array<i32>} : memref<1x512xf32, #tpu.memory_space<vmem>>, vector<1x512xf32>,
    return
  }
  func.func @transform_0(%arg0: i32) -> (i32, i32) {
    %c0_i32 = arith.constant 0 : i32
    %c0_i32_0 = arith.constant 0 : i32
    return %c0_i32, %arg0 : i32, i32
  }
  func.func @transform_1(%arg0: i32) -> (i32, i32, i32) {
    %c0_i32 = arith.constant 0 : i32
    %c0_i32_0 = arith.constant 0 : i32
    %c0_i32_1 = arith.constant 0 : i32
    %c0_i32_2 = arith.constant 0 : i32
    return %c0_i32, %c0_i32_0, %c0_i32_1 : i32, i32, i32
  }
  func.func @transform_2(%arg0: i32) -> (i32, i32, i32) {
    %c0_i32 = arith.constant 0 : i32
    %c0_i32_0 = arith.constant 0 : i32
    %c0_i32_1 = arith.constant 0 : i32
    %c0_i32_2 = arith.constant 0 : i32
    return %c0_i32, %c0_i32_0, %c0_i32_1 : i32, i32, i32
  }
  func.func @transform_3(%arg0: i32) -> (i32, i32) {
    %c0_i32 = arith.constant 0 : i32
    %c0_i32_0 = arith.constant 0 : i32
    %c0_i32_1 = arith.constant 0 : i32
    return %c0_i32, %c0_i32_0 : i32, i32
  }
  func.func @transform_4(%arg0: i32) -> (i32, i32) {
    %c0_i32 = arith.constant 0 : i32
    %c0_i32_0 = arith.constant 0 : i32
    %c0_i32_1 = arith.constant 0 : i32
    return %c0_i32, %c0_i32_0 : i32, i32
  }
  func.func @transform_5(%arg0: i32) -> (i32, i32) {
    %c0_i32 = arith.constant 0 : i32
    %c0_i32_0 = arith.constant 0 : i32
    return %c0_i32, %arg0 : i32, i32
  }
}

</mosaic_0001>

<llo_original>
// kernel: tpu_custom_call.1
$region0: #{tpu_custom_call.1}
  #allocation0 [shape = 'u32[]', space=smem, size = 0x4, offset = 0x4, fixed_abs, tag = 'smem constant byte address 0x4 - core index']
  #allocation1 [shape = 'u32[144,128]{1,0:T(1,128)}', space=vmem, size = 0x12000, scoped, tag = 'internal scratch']
  #allocation2 [shape = 'f32[1,1]{1,0:T(1,128)S(1)}', space=vmem, size = 0x200, scoped, tag = 'scoped memory for tpu_custom_call.1']
  %s0 = inlined_call_operand.hbm [shape: f32[32,512], index: 0, kind: input, shape index: {}]
  %s1 = inlined_call_operand.vmem [shape: f32[2,32,32], index: 1, kind: input, shape index: {}]
  %s2 = inlined_call_operand.vmem [shape: f32[2,32,1], index: 2, kind: input, shape index: {}]
  %s3 = inlined_call_operand.vmem [shape: f32[32,1], index: 3, kind: input, shape index: {}]
  %s4 = inlined_call_operand.<no memory space> [shape: f32[1,1], index: 4, kind: input, shape index: {}]
  %s5 = inlined_call_operand.hbm [shape: f32[1,512], index: 5, kind: output, shape index: {}]
  %s6 = sld [smem:[#allocation0]]
  $region34: #{tpu_custom_call.1} parent=0
    _
  %s8 = ssub.s32 1, %s6
  %s9 = scalar_select 0, %s8, %s6
  %v10 = vstv %s4
  %11 = vst [vmem:[#allocation2] sm:$0x1] %v10
  $region1: #{tpu_custom_call.1} parent=0
    #allocation3 [shape = 'u8[65536]{0}', space=vmem, size = 0x10000, scoped, tag = 'input window, operand 0, single buffered']
    #allocation4 [shape = 's32[1]{0}', space=sflag, size = 0x4, scoped, tag = 'scoped memory for tpu_custom_call.1']
    #allocation5 [shape = 's32[1]{0}', space=sflag, size = 0x4, scoped, tag = 'scoped memory for tpu_custom_call.1']
    #allocation6 [shape = 'u8[2048]{0}', space=vmem, size = 0x800, scoped, tag = 'output window, operand 0, single buffered']
    %12 = vsyncpa [#allocation4], 0
    %13 = vsyncpa [#allocation5], 0
    // Predicated region
    $region2: #{tpu_custom_call.1} parent=1 // pred_check
      _
    $region3: #{tpu_custom_call.1} parent=1 // pred_check_branch
      %15 = sbr.rel (0) target = $region5
    $region4: #{tpu_custom_call.1} parent=1 // pred_region
      %s17 = ssub.s32 2048, 2048
      %18 = vsyncadd [#allocation4], %s17
      %s19 = sshll.u32 [#allocation3], 4
      %s20 = int_to_ptr.vmem [resolvable:$true] %s19
      %25 = dma.hbm_to_vmem [thread:$0]  %s0, 2048, %s20, [#allocation4], 512, 512, 32
    $region5: #{tpu_custom_call.1} parent=1 // pred_fallthru
      _
    // Predicated region
    $region6: #{tpu_custom_call.1} parent=1 // pred_check
      _
    $region7: #{tpu_custom_call.1} parent=1 // pred_check_branch
      %27 = sbr.rel (0) target = $region9
    $region8: #{tpu_custom_call.1} parent=1 // pred_region
      _
    $region9: #{tpu_custom_call.1} parent=1 // pred_fallthru
      _
    // Predicated region
    $region10: #{tpu_custom_call.1} parent=1 // pred_check
      _
    $region11: #{tpu_custom_call.1} parent=1 // pred_check_branch
      %29 = sbr.rel (0) target = $region13
    $region12: #{tpu_custom_call.1} parent=1 // pred_region
      _
    $region13: #{tpu_custom_call.1} parent=1 // pred_fallthru
      _
    // Predicated region
    $region14: #{tpu_custom_call.1} parent=1 // pred_check
      _
    $region15: #{tpu_custom_call.1} parent=1 // pred_check_branch
      %31 = sbr.rel (0) target = $region17
    $region16: #{tpu_custom_call.1} parent=1 // pred_region
      _
    $region17: #{tpu_custom_call.1} parent=1 // pred_fallthru
      _
    // Predicated region
    $region18: #{tpu_custom_call.1} parent=1 // pred_check
      _
    $region19: #{tpu_custom_call.1} parent=1 // pred_check_branch
      %33 = sbr.rel (0) target = $region21
    $region20: #{tpu_custom_call.1} parent=1 // pred_region
      _
    $region21: #{tpu_custom_call.1} parent=1 // pred_fallthru
      _
    // Predicated region
    $region22: #{tpu_custom_call.1} parent=1 // pred_check
      _
    $region23: #{tpu_custom_call.1} parent=1 // pred_check_branch
      %35 = sbr.rel (0) target = $region25
    $region24: #{tpu_custom_call.1} parent=1 // pred_region
      %36 = dma.done [#allocation4], 2048
    $region25: #{tpu_custom_call.1} parent=1 // pred_fallthru
      _
    %v37 = vld [vmem:[#allocation3] sm:$0xff]
    %v38 = vld [vmem:[#allocation3 + $0x8] sm:$0xff]
    %v39 = vld [vmem:[#allocation3 + $0x10] sm:$0xff]
    %v40 = vld [vmem:[#allocation3 + $0x18] sm:$0xff]
    %v41 = vld [vmem:[#allocation3 + $0x20] sm:$0xff]
    %v42 = vld [vmem:[#allocation3 + $0x28] sm:$0xff]
    %v43 = vld [vmem:[#allocation3 + $0x30] sm:$0xff]
    %v44 = vld [vmem:[#allocation3 + $0x38] sm:$0xff]
    %v45 = vld [vmem:[#allocation3 + $0x40] sm:$0xff]
    %v46 = vld [vmem:[#allocation3 + $0x48] sm:$0xff]
    %v47 = vld [vmem:[#allocation3 + $0x50] sm:$0xff]
    %v48 = vld [vmem:[#allocation3 + $0x58] sm:$0xff]
    %v49 = vld [vmem:[#allocation3 + $0x60] sm:$0xff]
    %v50 = vld [vmem:[#allocation3 + $0x68] sm:$0xff]
    %v51 = vld [vmem:[#allocation3 + $0x70] sm:$0xff]
    %v52 = vld [vmem:[#allocation3 + $0x78] sm:$0xff]
    %v53 = vld [vmem:[%s1] sm:$0xff]
    %v54 = vld [vmem:[%s1 + $0x8] sm:$0xff]
    %v55 = vld [vmem:[%s1 + $0x10] sm:$0xff]
    %v56 = vld [vmem:[%s1 + $0x18] sm:$0xff]
    %v57 = vld [vmem:[%s2] sm:$0xff]
    %v58 = vld [vmem:[%s2 + $0x8] sm:$0xff]
    %v59 = vld [vmem:[%s2 + $0x10] sm:$0xff]
    %v60 = vld [vmem:[%s2 + $0x18] sm:$0xff]
    %62 = vset.pattern.permute.xlu0 0
    %63 = vperm.xlu0 %62, %v57
    %v64 = vpop.permute.xlu0 %63
    %67 = vset.pattern.permute.xlu0 0
    %68 = vperm.xlu0 %67, %v58
    %v69 = vpop.permute.xlu0 %68
    %72 = vset.pattern.permute.xlu0 0
    %73 = vperm.xlu0 %72, %v59
    %v74 = vpop.permute.xlu0 %73
    %77 = vset.pattern.permute.xlu0 0
    %78 = vperm.xlu0 %77, %v60
    %v79 = vpop.permute.xlu0 %78
    %vm81 = vcmask 261120
    %v83 = vsel %vm81, %v53, 0
    %v86 = vsel %vm81, %v54, 0
    %v89 = vsel %vm81, %v55, 0
    %v92 = vsel %vm81, %v56, 0
    %94 = vmatprep.subr.mxu0 0.0
    %95 = vmatpush1.msra.mxu0 0.0
    %96 = vmatprep.subr.mxu0 0.0
    %97 = vmatpush1.msra.mxu0 0.0
    %98 = vmatprep.subr.mxu0 0.0
    %99 = vmatpush1.msra.mxu0 0.0
    %100 = vmatprep.subr.mxu0 0.0
    %101 = vmatpush1.msra.mxu0 0.0
    %102 = vmatprep.subr.mxu0 0.0
    %103 = vmatpush1.msra.mxu0 0.0
    %104 = vmatprep.subr.mxu0 0.0
    %105 = vmatpush1.msra.mxu0 0.0
    %106 = vmatprep.subr.mxu0 0.0
    %107 = vmatpush1.msra.mxu0 0.0
    %108 = vmatprep.subr.mxu0 0.0
    %109 = vmatpush1.msra.mxu0 0.0
    %110 = vmatprep.subr.mxu0 0.0
    %111 = vmatpush1.msra.mxu0 0.0
    %112 = vmatprep.subr.mxu0 0.0
    %113 = vmatpush1.msra.mxu0 0.0
    %114 = vmatprep.subr.mxu0 0.0
    %115 = vmatpush1.msra.mxu0 0.0
    %116 = vmatprep.subr.mxu0 0.0
    %117 = vmatpush1.msra.mxu0 0.0
    %118 = vmatprep.subr.mxu0 %v50
    %119 = vmatpush1.msra.mxu0 %v49
    %120 = vmatprep.subr.mxu0 %v46
    %121 = vmatpush1.msra.mxu0 %v45
    %122 = vmatprep.subr.mxu0 %v42
    %123 = vmatpush1.msra.mxu0 %v41
    %124 = vmatprep.subr.mxu0 %v38
    %125 = vmatpush1.msra.mxu0 %v37
    %126 = vmatprep.subr.mxu0 0.0
    %127 = vmatpush2.msra.mxu0 0.0
    %128 = vmatprep.subr.mxu0 0.0
    %129 = vmatpush2.msra.mxu0 0.0
    %130 = vmatprep.subr.mxu0 0.0
    %131 = vmatpush2.msra.mxu0 0.0
    %132 = vmatprep.subr.mxu0 0.0
    %133 = vmatpush2.msra.mxu0 0.0
    %134 = vmatprep.subr.mxu0 0.0
    %135 = vmatpush2.msra.mxu0 0.0
    %136 = vmatprep.subr.mxu0 0.0
    %137 = vmatpush2.msra.mxu0 0.0
    %138 = vmatprep.subr.mxu0 0.0
    %139 = vmatpush2.msra.mxu0 0.0
    %140 = vmatprep.subr.mxu0 0.0
    %141 = vmatpush2.msra.mxu0 0.0
    %142 = vmatprep.subr.mxu0 0.0
    %143 = vmatpush2.msra.mxu0 0.0
    %144 = vmatprep.subr.mxu0 0.0
    %145 = vmatpush2.msra.mxu0 0.0
    %146 = vmatprep.subr.mxu0 0.0
    %147 = vmatpush2.msra.mxu0 0.0
    %148 = vmatprep.subr.mxu0 0.0
    %149 = vmatpush2.msra.mxu0 0.0
    %150 = vmatprep.subr.mxu0 0.0
    %151 = vmatpush2.msra.mxu0 0.0
    %152 = vmatprep.subr.mxu0 0.0
    %153 = vmatpush2.msra.mxu0 0.0
    %154 = vmatprep.subr.mxu0 0.0
    %155 = vmatpush2.msra.mxu0 0.0
    %156 = vmatprep.subr.mxu0 0.0
    %157 = vmatpush2.msra.mxu0 0.0
    %158 = vmatprep.mubr.f32.mxu0 0.0
    %159 = vmatmul.mubr.f32.gmra.mxu0 %v83
    %v160 = vpop.f32.mrf.mxu0
    %v161 = vadd.f32 %v64, %v160
    %v162 = vpop.f32.mrf.mxu0
    %v163 = vadd.f32 %v64, %v162
    %164 = vmatprep.mubr.f32.mxu0 0.0
    %165 = vmatmul.mubr.f32.gmra.mxu0 %v86
    %v166 = vpop.f32.mrf.mxu0
    %v167 = vadd.f32 %v69, %v166
    %v168 = vpop.f32.mrf.mxu0
    %v169 = vadd.f32 %v69, %v168
    %170 = vmatprep.mubr.f32.mxu0 0.0
    %171 = vmatmul.mubr.f32.gmra.mxu0 %v89
    %v172 = vpop.f32.mrf.mxu0
    %v173 = vadd.f32 %v74, %v172
    %v174 = vpop.f32.mrf.mxu0
    %v175 = vadd.f32 %v74, %v174
    %176 = vmatprep.mubr.f32.mxu0 0.0
    %177 = vmatmul.mubr.f32.gmra.mxu0 %v92
    %v178 = vpop.f32.mrf.mxu0
    %v179 = vadd.f32 %v79, %v178
    %v180 = vpop.f32.mrf.mxu0
    %v181 = vadd.f32 %v79, %v180
    %182 = vdwg.mxu0
    %183 = vmatprep.subr.mxu0 0.0
    %184 = vmatpush1.msra.mxu0 0.0
    %185 = vmatprep.subr.mxu0 0.0
    %186 = vmatpush1.msra.mxu0 0.0
    %187 = vmatprep.subr.mxu0 0.0
    %188 = vmatpush1.msra.mxu0 0.0
    %189 = vmatprep.subr.mxu0 0.0
    %190 = vmatpush1.msra.mxu0 0.0
    %191 = vmatprep.subr.mxu0 0.0
    %192 = vmatpush1.msra.mxu0 0.0
    %193 = vmatprep.subr.mxu0 0.0
    %194 = vmatpush1.msra.mxu0 0.0
    %195 = vmatprep.subr.mxu0 0.0
    %196 = vmatpush1.msra.mxu0 0.0
    %197 = vmatprep.subr.mxu0 0.0
    %198 = vmatpush1.msra.mxu0 0.0
    %199 = vmatprep.subr.mxu0 0.0
    %200 = vmatpush1.msra.mxu0 0.0
    %201 = vmatprep.subr.mxu0 0.0
    %202 = vmatpush1.msra.mxu0 0.0
    %203 = vmatprep.subr.mxu0 0.0
    %204 = vmatpush1.msra.mxu0 0.0
    %205 = vmatprep.subr.mxu0 0.0
    %206 = vmatpush1.msra.mxu0 0.0
    %207 = vmatprep.subr.mxu0 %v52
    %208 = vmatpush1.msra.mxu0 %v51
    %209 = vmatprep.subr.mxu0 %v48
    %210 = vmatpush1.msra.mxu0 %v47
    %211 = vmatprep.subr.mxu0 %v44
    %212 = vmatpush1.msra.mxu0 %v43
    %213 = vmatprep.subr.mxu0 %v40
    %214 = vmatpush1.msra.mxu0 %v39
    %215 = vmatprep.subr.mxu0 0.0
    %216 = vmatpush2.msra.mxu0 0.0
    %217 = vmatprep.subr.mxu0 0.0
    %218 = vmatpush2.msra.mxu0 0.0
    %219 = vmatprep.subr.mxu0 0.0
    %220 = vmatpush2.msra.mxu0 0.0
    %221 = vmatprep.subr.mxu0 0.0
    %222 = vmatpush2.msra.mxu0 0.0
    %223 = vmatprep.subr.mxu0 0.0
    %224 = vmatpush2.msra.mxu0 0.0
    %225 = vmatprep.subr.mxu0 0.0
    %226 = vmatpush2.msra.mxu0 0.0
    %227 = vmatprep.subr.mxu0 0.0
    %228 = vmatpush2.msra.mxu0 0.0
    %229 = vmatprep.subr.mxu0 0.0
    %230 = vmatpush2.msra.mxu0 0.0
    %231 = vmatprep.subr.mxu0 0.0
    %232 = vmatpush2.msra.mxu0 0.0
    %233 = vmatprep.subr.mxu0 0.0
    %234 = vmatpush2.msra.mxu0 0.0
    %235 = vmatprep.subr.mxu0 0.0
    %236 = vmatpush2.msra.mxu0 0.0
    %237 = vmatprep.subr.mxu0 0.0
    %238 = vmatpush2.msra.mxu0 0.0
    %239 = vmatprep.subr.mxu0 0.0
    %240 = vmatpush2.msra.mxu0 0.0
    %241 = vmatprep.subr.mxu0 0.0
    %242 = vmatpush2.msra.mxu0 0.0
    %243 = vmatprep.subr.mxu0 0.0
    %244 = vmatpush2.msra.mxu0 0.0
    %245 = vmatprep.subr.mxu0 0.0
    %246 = vmatpush2.msra.mxu0 0.0
    %247 = vmatprep.mubr.f32.mxu0 0.0
    %248 = vmatmul.mubr.f32.gmra.mxu0 %v83
    %v249 = vpop.f32.mrf.mxu0
    %v250 = vadd.f32 %v64, %v249
    %v251 = vpop.f32.mrf.mxu0
    %v252 = vadd.f32 %v64, %v251
    %253 = vmatprep.mubr.f32.mxu0 0.0
    %254 = vmatmul.mubr.f32.gmra.mxu0 %v86
    %v255 = vpop.f32.mrf.mxu0
    %v256 = vadd.f32 %v69, %v255
    %v257 = vpop.f32.mrf.mxu0
    %v258 = vadd.f32 %v69, %v257
    %259 = vmatprep.mubr.f32.mxu0 0.0
    %260 = vmatmul.mubr.f32.gmra.mxu0 %v89
    %v261 = vpop.f32.mrf.mxu0
    %v262 = vadd.f32 %v74, %v261
    %v263 = vpop.f32.mrf.mxu0
    %v264 = vadd.f32 %v74, %v263
    %265 = vmatprep.mubr.f32.mxu0 0.0
    %266 = vmatmul.mubr.f32.gmra.mxu0 %v92
    %v267 = vpop.f32.mrf.mxu0
    %v268 = vadd.f32 %v79, %v267
    %v269 = vpop.f32.mrf.mxu0
    %v270 = vadd.f32 %v79, %v269
    %271 = vdwg.mxu0
    %v272 = vmul.f32 %v161, 0.5
    %v273 = vmul.f32 %v163, 0.5
    %v274 = vmul.f32 %v250, 0.5
    %v275 = vmul.f32 %v252, 0.5
    %v276 = vmul.f32 %v167, 0.5
    %v277 = vmul.f32 %v169, 0.5
    %v278 = vmul.f32 %v256, 0.5
    %v279 = vmul.f32 %v258, 0.5
    %v280 = vmul.f32 %v173, 0.5
    %v281 = vmul.f32 %v175, 0.5
    %v282 = vmul.f32 %v262, 0.5
    %v283 = vmul.f32 %v264, 0.5
    %v284 = vmul.f32 %v179, 0.5
    %v285 = vmul.f32 %v181, 0.5
    %v286 = vmul.f32 %v268, 0.5
    %v287 = vmul.f32 %v270, 0.5
    %v288 = vmul.f32 %v161, 0.70710677
    %v289 = vmul.f32 %v163, 0.70710677
    %v290 = vmul.f32 %v250, 0.70710677
    %v291 = vmul.f32 %v252, 0.70710677
    %v292 = vmul.f32 %v167, 0.70710677
    %v293 = vmul.f32 %v169, 0.70710677
    %v294 = vmul.f32 %v256, 0.70710677
    %v295 = vmul.f32 %v258, 0.70710677
    %v296 = vmul.f32 %v173, 0.70710677
    %v297 = vmul.f32 %v175, 0.70710677
    %v298 = vmul.f32 %v262, 0.70710677
    %v299 = vmul.f32 %v264, 0.70710677
    %v300 = vmul.f32 %v179, 0.70710677
    %v301 = vmul.f32 %v181, 0.70710677
    %v302 = vmul.f32 %v268, 0.70710677
    %v303 = vmul.f32 %v270, 0.70710677
    %v304 = verf.f32.pop %v288
    %v305 = verf.f32.pop %v289
    %v306 = verf.f32.pop %v290
    %v307 = verf.f32.pop %v291
    %v308 = verf.f32.pop %v292
    %v309 = verf.f32.pop %v293
    %v310 = verf.f32.pop %v294
    %v311 = verf.f32.pop %v295
    %v312 = verf.f32.pop %v296
    %v313 = verf.f32.pop %v297
    %v314 = verf.f32.pop %v298
    %v315 = verf.f32.pop %v299
    %v316 = verf.f32.pop %v300
    %v317 = verf.f32.pop %v301
    %v318 = verf.f32.pop %v302
    %v319 = verf.f32.pop %v303
    %v320 = vadd.f32 %v304, 1.0
    %v321 = vadd.f32 %v305, 1.0
    %v322 = vadd.f32 %v306, 1.0
    %v323 = vadd.f32 %v307, 1.0
    %v324 = vadd.f32 %v308, 1.0
    %v325 = vadd.f32 %v309, 1.0
    %v326 = vadd.f32 %v310, 1.0
    %v327 = vadd.f32 %v311, 1.0
    %v328 = vadd.f32 %v312, 1.0
    %v329 = vadd.f32 %v313, 1.0
    %v330 = vadd.f32 %v314, 1.0
    %v331 = vadd.f32 %v315, 1.0
    %v332 = vadd.f32 %v316, 1.0
    %v333 = vadd.f32 %v317, 1.0
    %v334 = vadd.f32 %v318, 1.0
    %v335 = vadd.f32 %v319, 1.0
    %v336 = vmul.f32 %v272, %v320
    %v337 = vmul.f32 %v273, %v321
    %v338 = vmul.f32 %v274, %v322
    %v339 = vmul.f32 %v275, %v323
    %v340 = vmul.f32 %v276, %v324
    %v341 = vmul.f32 %v277, %v325
    %v342 = vmul.f32 %v278, %v326
    %v343 = vmul.f32 %v279, %v327
    %v344 = vmul.f32 %v280, %v328
    %v345 = vmul.f32 %v281, %v329
    %v346 = vmul.f32 %v282, %v330
    %v347 = vmul.f32 %v283, %v331
    %v348 = vmul.f32 %v284, %v332
    %v349 = vmul.f32 %v285, %v333
    %v350 = vmul.f32 %v286, %v334
    %v351 = vmul.f32 %v287, %v335
    %s352 = scalar_lea.vmem %s1, 32
    %v353 = vld [vmem:[%s352] sm:$0xff]
    %v354 = vld [vmem:[%s352 + $0x8] sm:$0xff]
    %v355 = vld [vmem:[%s352 + $0x10] sm:$0xff]
    %v356 = vld [vmem:[%s352 + $0x18] sm:$0xff]
    %s357 = scalar_lea.vmem %s2, 32
    %v358 = vld [vmem:[%s357] sm:$0xff]
    %v359 = vld [vmem:[%s357 + $0x8] sm:$0xff]
    %v360 = vld [vmem:[%s357 + $0x10] sm:$0xff]
    %v361 = vld [vmem:[%s357 + $0x18] sm:$0xff]
    %363 = vset.pattern.permute.xlu0 0
    %364 = vperm.xlu0 %363, %v358
    %v365 = vpop.permute.xlu0 %364
    %368 = vset.pattern.permute.xlu0 0
    %369 = vperm.xlu0 %368, %v359
    %v370 = vpop.permute.xlu0 %369
    %373 = vset.pattern.permute.xlu0 0
    %374 = vperm.xlu0 %373, %v360
    %v375 = vpop.permute.xlu0 %374
    %378 = vset.pattern.permute.xlu0 0
    %379 = vperm.xlu0 %378, %v361
    %v380 = vpop.permute.xlu0 %379
    %v383 = vsel %vm81, %v353, 0
    %v386 = vsel %vm81, %v354, 0
    %v389 = vsel %vm81, %v355, 0
    %v392 = vsel %vm81, %v356, 0
    %394 = vmatprep.subr.mxu0 0.0
    %395 = vmatpush1.msra.mxu0 0.0
    %396 = vmatprep.subr.mxu0 0.0
    %397 = vmatpush1.msra.mxu0 0.0
    %398 = vmatprep.subr.mxu0 0.0
    %399 = vmatpush1.msra.mxu0 0.0
    %400 = vmatprep.subr.mxu0 0.0
    %401 = vmatpush1.msra.mxu0 0.0
    %402 = vmatprep.subr.mxu0 0.0
    %403 = vmatpush1.msra.mxu0 0.0
    %404 = vmatprep.subr.mxu0 0.0
    %405 = vmatpush1.msra.mxu0 0.0
    %406 = vmatprep.subr.mxu0 0.0
    %407 = vmatpush1.msra.mxu0 0.0
    %408 = vmatprep.subr.mxu0 0.0
    %409 = vmatpush1.msra.mxu0 0.0
    %410 = vmatprep.subr.mxu0 0.0
    %411 = vmatpush1.msra.mxu0 0.0
    %412 = vmatprep.subr.mxu0 0.0
    %413 = vmatpush1.msra.mxu0 0.0
    %414 = vmatprep.subr.mxu0 0.0
    %415 = vmatpush1.msra.mxu0 0.0
    %416 = vmatprep.subr.mxu0 0.0
    %417 = vmatpush1.msra.mxu0 0.0
    %418 = vmatprep.subr.mxu0 %v349
    %419 = vmatpush1.msra.mxu0 %v348
    %420 = vmatprep.subr.mxu0 %v345
    %421 = vmatpush1.msra.mxu0 %v344
    %422 = vmatprep.subr.mxu0 %v341
    %423 = vmatpush1.msra.mxu0 %v340
    %424 = vmatprep.subr.mxu0 %v337
    %425 = vmatpush1.msra.mxu0 %v336
    %426 = vmatprep.subr.mxu0 0.0
    %427 = vmatpush2.msra.mxu0 0.0
    %428 = vmatprep.subr.mxu0 0.0
    %429 = vmatpush2.msra.mxu0 0.0
    %430 = vmatprep.subr.mxu0 0.0
    %431 = vmatpush2.msra.mxu0 0.0
    %432 = vmatprep.subr.mxu0 0.0
    %433 = vmatpush2.msra.mxu0 0.0
    %434 = vmatprep.subr.mxu0 0.0
    %435 = vmatpush2.msra.mxu0 0.0
    %436 = vmatprep.subr.mxu0 0.0
    %437 = vmatpush2.msra.mxu0 0.0
    %438 = vmatprep.subr.mxu0 0.0
    %439 = vmatpush2.msra.mxu0 0.0
    %440 = vmatprep.subr.mxu0 0.0
    %441 = vmatpush2.msra.mxu0 0.0
    %442 = vmatprep.subr.mxu0 0.0
    %443 = vmatpush2.msra.mxu0 0.0
    %444 = vmatprep.subr.mxu0 0.0
    %445 = vmatpush2.msra.mxu0 0.0
    %446 = vmatprep.subr.mxu0 0.0
    %447 = vmatpush2.msra.mxu0 0.0
    %448 = vmatprep.subr.mxu0 0.0
    %449 = vmatpush2.msra.mxu0 0.0
    %450 = vmatprep.subr.mxu0 0.0
    %451 = vmatpush2.msra.mxu0 0.0
    %452 = vmatprep.subr.mxu0 0.0
    %453 = vmatpush2.msra.mxu0 0.0
    %454 = vmatprep.subr.mxu0 0.0
    %455 = vmatpush2.msra.mxu0 0.0
    %456 = vmatprep.subr.mxu0 0.0
    %457 = vmatpush2.msra.mxu0 0.0
    %458 = vmatprep.mubr.f32.mxu0 0.0
    %459 = vmatmul.mubr.f32.gmra.mxu0 %v383
    %v460 = vpop.f32.mrf.mxu0
    %v461 = vadd.f32 %v365, %v460
    %v462 = vpop.f32.mrf.mxu0
    %v463 = vadd.f32 %v365, %v462
    %464 = vmatprep.mubr.f32.mxu0 0.0
    %465 = vmatmul.mubr.f32.gmra.mxu0 %v386
    %v466 = vpop.f32.mrf.mxu0
    %v467 = vadd.f32 %v370, %v466
    %v468 = vpop.f32.mrf.mxu0
    %v469 = vadd.f32 %v370, %v468
    %470 = vmatprep.mubr.f32.mxu0 0.0
    %471 = vmatmul.mubr.f32.gmra.mxu0 %v389
    %v472 = vpop.f32.mrf.mxu0
    %v473 = vadd.f32 %v375, %v472
    %v474 = vpop.f32.mrf.mxu0
    %v475 = vadd.f32 %v375, %v474
    %476 = vmatprep.mubr.f32.mxu0 0.0
    %477 = vmatmul.mubr.f32.gmra.mxu0 %v392
    %v478 = vpop.f32.mrf.mxu0
    %v479 = vadd.f32 %v380, %v478
    %v480 = vpop.f32.mrf.mxu0
    %v481 = vadd.f32 %v380, %v480
    %482 = vdwg.mxu0
    %483 = vmatprep.subr.mxu0 0.0
    %484 = vmatpush1.msra.mxu0 0.0
    %485 = vmatprep.subr.mxu0 0.0
    %486 = vmatpush1.msra.mxu0 0.0
    %487 = vmatprep.subr.mxu0 0.0
    %488 = vmatpush1.msra.mxu0 0.0
    %489 = vmatprep.subr.mxu0 0.0
    %490 = vmatpush1.msra.mxu0 0.0
    %491 = vmatprep.subr.mxu0 0.0
    %492 = vmatpush1.msra.mxu0 0.0
    %493 = vmatprep.subr.mxu0 0.0
    %494 = vmatpush1.msra.mxu0 0.0
    %495 = vmatprep.subr.mxu0 0.0
    %496 = vmatpush1.msra.mxu0 0.0
    %497 = vmatprep.subr.mxu0 0.0
    %498 = vmatpush1.msra.mxu0 0.0
    %499 = vmatprep.subr.mxu0 0.0
    %500 = vmatpush1.msra.mxu0 0.0
    %501 = vmatprep.subr.mxu0 0.0
    %502 = vmatpush1.msra.mxu0 0.0
    %503 = vmatprep.subr.mxu0 0.0
    %504 = vmatpush1.msra.mxu0 0.0
    %505 = vmatprep.subr.mxu0 0.0
    %506 = vmatpush1.msra.mxu0 0.0
    %507 = vmatprep.subr.mxu0 %v351
    %508 = vmatpush1.msra.mxu0 %v350
    %509 = vmatprep.subr.mxu0 %v347
    %510 = vmatpush1.msra.mxu0 %v346
    %511 = vmatprep.subr.mxu0 %v343
    %512 = vmatpush1.msra.mxu0 %v342
    %513 = vmatprep.subr.mxu0 %v339
    %514 = vmatpush1.msra.mxu0 %v338
    %515 = vmatprep.subr.mxu0 0.0
    %516 = vmatpush2.msra.mxu0 0.0
    %517 = vmatprep.subr.mxu0 0.0
    %518 = vmatpush2.msra.mxu0 0.0
    %519 = vmatprep.subr.mxu0 0.0
    %520 = vmatpush2.msra.mxu0 0.0
    %521 = vmatprep.subr.mxu0 0.0
    %522 = vmatpush2.msra.mxu0 0.0
    %523 = vmatprep.subr.mxu0 0.0
    %524 = vmatpush2.msra.mxu0 0.0
    %525 = vmatprep.subr.mxu0 0.0
    %526 = vmatpush2.msra.mxu0 0.0
    %527 = vmatprep.subr.mxu0 0.0
    %528 = vmatpush2.msra.mxu0 0.0
    %529 = vmatprep.subr.mxu0 0.0
    %530 = vmatpush2.msra.mxu0 0.0
    %531 = vmatprep.subr.mxu0 0.0
    %532 = vmatpush2.msra.mxu0 0.0
    %533 = vmatprep.subr.mxu0 0.0
    %534 = vmatpush2.msra.mxu0 0.0
    %535 = vmatprep.subr.mxu0 0.0
    %536 = vmatpush2.msra.mxu0 0.0
    %537 = vmatprep.subr.mxu0 0.0
    %538 = vmatpush2.msra.mxu0 0.0
    %539 = vmatprep.subr.mxu0 0.0
    %540 = vmatpush2.msra.mxu0 0.0
    %541 = vmatprep.subr.mxu0 0.0
    %542 = vmatpush2.msra.mxu0 0.0
    %543 = vmatprep.subr.mxu0 0.0
    %544 = vmatpush2.msra.mxu0 0.0
    %545 = vmatprep.subr.mxu0 0.0
    %546 = vmatpush2.msra.mxu0 0.0
    %547 = vmatprep.mubr.f32.mxu0 0.0
    %548 = vmatmul.mubr.f32.gmra.mxu0 %v383
    %v549 = vpop.f32.mrf.mxu0
    %v550 = vadd.f32 %v365, %v549
    %v551 = vpop.f32.mrf.mxu0
    %v552 = vadd.f32 %v365, %v551
    %553 = vmatprep.mubr.f32.mxu0 0.0
    %554 = vmatmul.mubr.f32.gmra.mxu0 %v386
    %v555 = vpop.f32.mrf.mxu0
    %v556 = vadd.f32 %v370, %v555
    %v557 = vpop.f32.mrf.mxu0
    %v558 = vadd.f32 %v370, %v557
    %559 = vmatprep.mubr.f32.mxu0 0.0
    %560 = vmatmul.mubr.f32.gmra.mxu0 %v389
    %v561 = vpop.f32.mrf.mxu0
    %v562 = vadd.f32 %v375, %v561
    %v563 = vpop.f32.mrf.mxu0
    %v564 = vadd.f32 %v375, %v563
    %565 = vmatprep.mubr.f32.mxu0 0.0
    %566 = vmatmul.mubr.f32.gmra.mxu0 %v392
    %v567 = vpop.f32.mrf.mxu0
    %v568 = vadd.f32 %v380, %v567
    %v569 = vpop.f32.mrf.mxu0
    %v570 = vadd.f32 %v380, %v569
    %571 = vdwg.mxu0
    %v572 = vmul.f32 %v461, 0.5
    %v573 = vmul.f32 %v463, 0.5
    %v574 = vmul.f32 %v550, 0.5
    %v575 = vmul.f32 %v552, 0.5
    %v576 = vmul.f32 %v467, 0.5
    %v577 = vmul.f32 %v469, 0.5
    %v578 = vmul.f32 %v556, 0.5
    %v579 = vmul.f32 %v558, 0.5
    %v580 = vmul.f32 %v473, 0.5
    %v581 = vmul.f32 %v475, 0.5
    %v582 = vmul.f32 %v562, 0.5
    %v583 = vmul.f32 %v564, 0.5
    %v584 = vmul.f32 %v479, 0.5
    %v585 = vmul.f32 %v481, 0.5
    %v586 = vmul.f32 %v568, 0.5
    %v587 = vmul.f32 %v570, 0.5
    %v588 = vmul.f32 %v461, 0.70710677
    %v589 = vmul.f32 %v463, 0.70710677
    %v590 = vmul.f32 %v550, 0.70710677
    %v591 = vmul.f32 %v552, 0.70710677
    %v592 = vmul.f32 %v467, 0.70710677
    %v593 = vmul.f32 %v469, 0.70710677
    %v594 = vmul.f32 %v556, 0.70710677
    %v595 = vmul.f32 %v558, 0.70710677
    %v596 = vmul.f32 %v473, 0.70710677
    %v597 = vmul.f32 %v475, 0.70710677
    %v598 = vmul.f32 %v562, 0.70710677
    %v599 = vmul.f32 %v564, 0.70710677
    %v600 = vmul.f32 %v479, 0.70710677
    %v601 = vmul.f32 %v481, 0.70710677
    %v602 = vmul.f32 %v568, 0.70710677
    %v603 = vmul.f32 %v570, 0.70710677
    %v604 = verf.f32.pop %v588
    %v605 = verf.f32.pop %v589
    %v606 = verf.f32.pop %v590
    %v607 = verf.f32.pop %v591
    %v608 = verf.f32.pop %v592
    %v609 = verf.f32.pop %v593
    %v610 = verf.f32.pop %v594
    %v611 = verf.f32.pop %v595
    %v612 = verf.f32.pop %v596
    %v613 = verf.f32.pop %v597
    %v614 = verf.f32.pop %v598
    %v615 = verf.f32.pop %v599
    %v616 = verf.f32.pop %v600
    %v617 = verf.f32.pop %v601
    %v618 = verf.f32.pop %v602
    %v619 = verf.f32.pop %v603
    %v620 = vadd.f32 %v604, 1.0
    %v621 = vadd.f32 %v605, 1.0
    %v622 = vadd.f32 %v606, 1.0
    %v623 = vadd.f32 %v607, 1.0
    %v624 = vadd.f32 %v608, 1.0
    %v625 = vadd.f32 %v609, 1.0
    %v626 = vadd.f32 %v610, 1.0
    %v627 = vadd.f32 %v611, 1.0
    %v628 = vadd.f32 %v612, 1.0
    %v629 = vadd.f32 %v613, 1.0
    %v630 = vadd.f32 %v614, 1.0
    %v631 = vadd.f32 %v615, 1.0
    %v632 = vadd.f32 %v616, 1.0
    %v633 = vadd.f32 %v617, 1.0
    %v634 = vadd.f32 %v618, 1.0
    %v635 = vadd.f32 %v619, 1.0
    %v636 = vmul.f32 %v572, %v620
    %v637 = vmul.f32 %v573, %v621
    %v638 = vmul.f32 %v574, %v622
    %v639 = vmul.f32 %v575, %v623
    %v640 = vmul.f32 %v576, %v624
    %v641 = vmul.f32 %v577, %v625
    %v642 = vmul.f32 %v578, %v626
    %v643 = vmul.f32 %v579, %v627
    %v644 = vmul.f32 %v580, %v628
    %v645 = vmul.f32 %v581, %v629
    %v646 = vmul.f32 %v582, %v630
    %v647 = vmul.f32 %v583, %v631
    %v648 = vmul.f32 %v584, %v632
    %v649 = vmul.f32 %v585, %v633
    %v650 = vmul.f32 %v586, %v634
    %v651 = vmul.f32 %v587, %v635
    %v652 = vld [vmem:[%s3] sm:$0xff]
    %v653 = vld [vmem:[%s3 + $0x8] sm:$0xff]
    %v654 = vld [vmem:[%s3 + $0x10] sm:$0xff]
    %v655 = vld [vmem:[%s3 + $0x18] sm:$0xff]
    %657 = vset.pattern.permute.xlu0 0
    %658 = vperm.xlu0 %657, %v652
    %v659 = vpop.permute.xlu0 %658
    %662 = vset.pattern.permute.xlu0 0
    %663 = vperm.xlu0 %662, %v653
    %v664 = vpop.permute.xlu0 %663
    %667 = vset.pattern.permute.xlu0 0
    %668 = vperm.xlu0 %667, %v654
    %v669 = vpop.permute.xlu0 %668
    %672 = vset.pattern.permute.xlu0 0
    %673 = vperm.xlu0 %672, %v655
    %v674 = vpop.permute.xlu0 %673
    %v676 = vmul.f32 %v636, %v659
    %v677 = vmul.f32 %v637, %v659
    %v678 = vmul.f32 %v638, %v659
    %v679 = vmul.f32 %v639, %v659
    %v680 = vmul.f32 %v640, %v664
    %v681 = vmul.f32 %v641, %v664
    %v682 = vmul.f32 %v642, %v664
    %v683 = vmul.f32 %v643, %v664
    %v684 = vmul.f32 %v644, %v669
    %v685 = vmul.f32 %v645, %v669
    %v686 = vmul.f32 %v646, %v669
    %v687 = vmul.f32 %v647, %v669
    %v688 = vmul.f32 %v648, %v674
    %v689 = vmul.f32 %v649, %v674
    %v690 = vmul.f32 %v650, %v674
    %v691 = vmul.f32 %v651, %v674
    %v692 = vadd.f32 %v676, %v680
    %v693 = vadd.f32 %v692, %v684
    %v694 = vadd.f32 %v693, %v688
    %v695 = vrot.slane %v694, 4
    %v696 = vadd.f32 %v694, %v695
    %v697 = vrot.slane %v696, 2
    %v698 = vadd.f32 %v696, %v697
    %v699 = vrot.slane %v698, 1
    %v700 = vadd.f32 %v698, %v699
    %v701 = vadd.f32 %v677, %v681
    %v702 = vadd.f32 %v701, %v685
    %v703 = vadd.f32 %v702, %v689
    %v704 = vrot.slane %v703, 4
    %v705 = vadd.f32 %v703, %v704
    %v706 = vrot.slane %v705, 2
    %v707 = vadd.f32 %v705, %v706
    %v708 = vrot.slane %v707, 1
    %v709 = vadd.f32 %v707, %v708
    %v710 = vadd.f32 %v678, %v682
    %v711 = vadd.f32 %v710, %v686
    %v712 = vadd.f32 %v711, %v690
    %v713 = vrot.slane %v712, 4
    %v714 = vadd.f32 %v712, %v713
    %v715 = vrot.slane %v714, 2
    %v716 = vadd.f32 %v714, %v715
    %v717 = vrot.slane %v716, 1
    %v718 = vadd.f32 %v716, %v717
    %v719 = vadd.f32 %v679, %v683
    %v720 = vadd.f32 %v719, %v687
    %v721 = vadd.f32 %v720, %v691
    %v722 = vrot.slane %v721, 4
    %v723 = vadd.f32 %v721, %v722
    %v724 = vrot.slane %v723, 2
    %v725 = vadd.f32 %v723, %v724
    %v726 = vrot.slane %v725, 1
    %v727 = vadd.f32 %v725, %v726
    %v728 = vld [vmem:[#allocation2] sm:$0x1]
    %730 = vset.pattern.permute.xlu0 0
    %731 = vperm.xlu0 %730, %v728
    %v732 = vpop.permute.xlu0 %731
    %v734 = vlaneseq
    %v735 = vshrl.u32 %v734, 7
    %v736 = vsub.s32 0, %v735
    %v737 = vrot.slane %v732, %v736
    %v738 = vadd.f32 %v700, %v737
    %v739 = vadd.f32 %v709, %v737
    %v740 = vadd.f32 %v718, %v737
    %v741 = vadd.f32 %v727, %v737
    %v746 = vcombine.low %v738, %v739
    %v747 = vcombine.low %v740, %v741
    %v749 = vunpack.c.l.s4 1966171168
    %v750 = vunpack.c.0.s8 %v749
    %v751 = vlaneseq
    %v752 = vshrl.u32 %v751, 7
    %v753 = vsub.s32 %v750, %v752
    %v754 = vrot.slane %v746, %v753
    %v756 = vunpack.c.l.s4 1966171168
    %v757 = vunpack.c.0.s8 %v756
    %v758 = vlaneseq
    %v759 = vshrl.u32 %v758, 7
    %v760 = vsub.s32 %v757, %v759
    %v761 = vrot.slane %v747, %v760
    %v762 = vcombine.low %v754, %v761
    %v764 = vunpack.c.l.s4 1966171168
    %v765 = vunpack.c.0.s8 %v764
    %v766 = vlaneseq
    %v767 = vshrl.u32 %v766, 7
    %v768 = vsub.s32 %v765, %v767
    %v769 = vrot.slane %v762, %v768
    %v771 = vlaneseq
    %vm772 = vcmp.ge.s32.totalorder %v771, 0
    %vm773 = vcmp.lt.s32.totalorder %v771, 512
    %vm774 = vmand %vm772, %vm773
    %775 = vst.msk [vmem:[#allocation6] sm:$0xf] %vm774, %v769
    // Predicated region
    $region26: #{tpu_custom_call.1} parent=1 // pred_check
      _
    $region27: #{tpu_custom_call.1} parent=1 // pred_check_branch
      %777 = sbr.rel (0) target = $region29
    $region28: #{tpu_custom_call.1} parent=1 // pred_region
      %s779 = ssub.s32 64, 64
      %780 = vsyncadd [#allocation5], %s779
      %s782 = sshll.u32 [#allocation6], 4
      %s783 = int_to_ptr.vmem [resolvable:$true] %s782
      %785 = dma.vmem_to_hbm [thread:$0]  %s783, 64, %s5, [#allocation5]
    $region29: #{tpu_custom_call.1} parent=1 // pred_fallthru
      _
    // Predicated region
    $region30: #{tpu_custom_call.1} parent=1 // pred_check
      _
    $region31: #{tpu_custom_call.1} parent=1 // pred_check_branch
      %787 = sbr.rel (0) target = $region33
    $region32: #{tpu_custom_call.1} parent=1 // pred_region
      %788 = dma.done [#allocation5], 64
    $region33: #{tpu_custom_call.1} parent=1 // pred_fallthru
      _
    %789 = vsyncpa [#allocation4], 1
    %790 = vsyncpa [#allocation5], 1

</llo_original>
